<compile_context>
chip_gen: v6e
topology: v6e:2x2x1
jax: 0.10.0
libtpu: 0.0.40
codegen_flags: <defaults>
</compile_context>

<pallas_src>
import jax
import jax.numpy as jnp
from jax.experimental import pallas as pl
from jax.experimental.pallas import tpu as pltpu


def _postblock_kernel(x_ref, w_ref, b_ref, o_ref):
    # x_ref: (C_in, tT)   -- batch dim squeezed out by the BlockSpec
    # w_ref: (C_out, C_in)
    # b_ref: (C_out, 1)   -- float32
    # o_ref: (C_out, tT)
    x = jnp.maximum(x_ref[...], 0.0)                                 # fused ReLU
    acc = jnp.dot(w_ref[...], x, preferred_element_type=jnp.float32)  # MXU, f32 acc
    o_ref[...] = (acc + b_ref[...]).astype(o_ref.dtype)


def postblock_forward(x_nct, v, g, bias, *, t_tile=512):
    """ReLU -> weight-normalized 1x1 Conv1d, computed in native (B, C, T) layout.

    x_nct: (B, C_in, T); v: (C_out, C_in, 1); g: (C_out,); bias: (C_out,).
    """
    B, C_in, T = x_nct.shape
    C_out = v.shape[0]

    # weight_norm parameter glue (plain JAX, done once outside the kernel):
    #   weight = g * v / ||v||, norm taken over dims (1, 2) per output channel.
    v_f32 = v.astype(jnp.float32)
    v_norm = jnp.sqrt(jnp.sum(v_f32 ** 2, axis=(1, 2), keepdims=True))
    w_eff = g.reshape(C_out, 1, 1).astype(jnp.float32) * v_f32 / v_norm  # (C_out, C_in, 1)
    w_mat = w_eff[:, :, 0].astype(x_nct.dtype)                            # (C_out, C_in)
    b_col = bias.reshape(C_out, 1).astype(jnp.float32)                    # (C_out, 1)

    # Lane-dense T tiling: the last dim of every block is either the full T
    # (small inputs) or a multiple of 128, satisfying the (8, 128) constraint
    # and keeping stores unmasked.  tT <= 512 keeps 2x double-buffered in/out
    # blocks comfortably inside even v5e's 16 MiB scoped-VMEM default.
    if T <= t_tile:
        tT = T
    else:
        tT = max((t_tile // 128) * 128, 128)
    grid = (B, pl.cdiv(T, tT))

    return pl.pallas_call(
        _postblock_kernel,
        out_shape=jax.ShapeDtypeStruct((B, C_out, T), x_nct.dtype),
        grid=grid,
        in_specs=[
            # x: one batch row, one T tile per grid point (batch dim squeezed)
            pl.BlockSpec((None, C_in, tT), lambda b, t: (b, 0, t)),
            # weight / bias: whole array, resident across the grid
            pl.BlockSpec((C_out, C_in), lambda b, t: (0, 0)),
            pl.BlockSpec((C_out, 1), lambda b, t: (0, 0)),
        ],
        out_specs=pl.BlockSpec((None, C_out, tT), lambda b, t: (b, 0, t)),
        compiler_params=pltpu.CompilerParams(
            # Both axes are independent (no accumulation across the grid),
            # so mark them parallel -> megacore sharding on v7x.
            dimension_semantics=("parallel", "parallel"),
        ),
    )(x_nct, w_mat, b_col)


if __name__ == "__main__":
    key = jax.random.PRNGKey(0)
    k_x, k_v, k_b = jax.random.split(key, 3)

    B, C_in, C_out, T = 2, 4, 8, 16

    x = jax.random.normal(k_x, (B, C_in, T), dtype=jnp.float32)
    # Conv1d weight shape: (out_channels, in_channels, kernel_size=1)
    v = jax.random.normal(k_v, (C_out, C_in, 1), dtype=jnp.float32) * 0.1
    # weight_norm init: g = ||v|| per output channel (effective weight == v at init)
    g = jnp.sqrt(jnp.sum(v ** 2, axis=(1, 2)))
    bias = jax.random.normal(k_b, (C_out,), dtype=jnp.float32) * 0.01

    out = postblock_forward(x, v, g, bias)
    jax.block_until_ready(out)

    # pure-JAX reference check
    w_ref = (g.reshape(C_out, 1, 1) * v /
             jnp.sqrt(jnp.sum(v ** 2, axis=(1, 2), keepdims=True)))[:, :, 0]  # (C_out, C_in)
    ref = jnp.einsum("oc,bct->bot", w_ref, jnp.maximum(x, 0.0)) + bias.reshape(1, C_out, 1)
    assert out.shape == (B, C_out, T)
    assert jnp.allclose(out, ref, atol=1e-5, rtol=1e-5)

    print("KERNEL_OK")
</pallas_src>

<mosaic_0001>
module attributes {stable_mosaic.version = 11 : i64} {
  func.func @_postblock_kernel(%arg0: i32, %arg1: i32, %arg2: memref<1x4x16xf32, #tpu.memory_space<vmem>>, %arg3: memref<8x4xf32, #tpu.memory_space<vmem>>, %arg4: memref<8x1xf32, #tpu.memory_space<vmem>>, %arg5: memref<1x8x16xf32, #tpu.memory_space<vmem>>) attributes {dimension_semantics = [#tpu.dimension_semantics<parallel>, #tpu.dimension_semantics<parallel>], iteration_bounds = array<i64: 2, 1>, scalar_prefetch = 0 : i64, scratch_operands = 0 : i64, tpu.core_type = #tpu.core_type<tc>, window_params = [{transform_indices = @transform_0, window_bounds = array<i64: 1, 4, 16>}, {pipeline_mode = #tpu.pipeline_mode<synchronous>, transform_indices = @transform_1, window_bounds = array<i64: 8, 4>}, {pipeline_mode = #tpu.pipeline_mode<synchronous>, transform_indices = @transform_2, window_bounds = array<i64: 8, 1>}, {transform_indices = @transform_3, window_bounds = array<i64: 1, 8, 16>}]} {
    %c0 = arith.constant 0 : index
    %c0_0 = arith.constant 0 : index
    %c0_1 = arith.constant 0 : index
    %0 = vector.load %arg2[%c0, %c0_0, %c0_1] : memref<1x4x16xf32, #tpu.memory_space<vmem>>, vector<1x4x16xf32>
    %1 = vector.shape_cast %0 : vector<1x4x16xf32> to vector<4x16xf32>
    %cst = arith.constant 0.000000e+00 : f32
    %2 = vector.broadcast %cst : f32 to vector<4x16xf32>
    %3 = arith.maximumf %1, %2 : vector<4x16xf32>
    %c0_2 = arith.constant 0 : index
    %c0_3 = arith.constant 0 : index
    %4 = vector.load %arg3[%c0_2, %c0_3] : memref<8x4xf32, #tpu.memory_space<vmem>>, vector<8x4xf32>
    %cst_4 = arith.constant dense<0.000000e+00> : vector<8x16xf32>
    %5 = tpu.matmul %4, %3, %cst_4 {dimension_numbers = #tpu.dot_dimension_numbers<[1], [0], [0], [1], [0, 0, 1, 1], [], []>} : vector<8x4xf32>, vector<4x16xf32>, vector<8x16xf32> -> vector<8x16xf32>
    %c0_5 = arith.constant 0 : index
    %c0_6 = arith.constant 0 : index
    %6 = vector.load %arg4[%c0_5, %c0_6] : memref<8x1xf32, #tpu.memory_space<vmem>>, vector<8x1xf32>
    %7 = vector.broadcast %6 : vector<8x1xf32> to vector<8x16xf32>
    %8 = arith.addf %5, %7 : vector<8x16xf32>
    %c0_7 = arith.constant 0 : index
    %c0_8 = arith.constant 0 : index
    %c0_9 = arith.constant 0 : index
    %9 = vector.load %arg5[%c0_7, %c0_8, %c0_9] : memref<1x8x16xf32, #tpu.memory_space<vmem>>, vector<1x8x16xf32>
    %10 = vector.shape_cast %9 : vector<1x8x16xf32> to vector<8x16xf32>
    %11 = vector.shape_cast %8 : vector<8x16xf32> to vector<1x8x16xf32>
    tpu.vector_store %arg5[%c0_7, %c0_8, %c0_9], %11 {strides = array<i32>} : memref<1x8x16xf32, #tpu.memory_space<vmem>>, vector<1x8x16xf32>,
    return
  }
  func.func @transform_0(%arg0: i32, %arg1: i32) -> (i32, i32, i32) {
    %c0_i32 = arith.constant 0 : i32
    %c0_i32_0 = arith.constant 0 : i32
    return %arg0, %c0_i32, %arg1 : i32, i32, i32
  }
  func.func @transform_1(%arg0: i32, %arg1: i32) -> (i32, i32) {
    %c0_i32 = arith.constant 0 : i32
    %c0_i32_0 = arith.constant 0 : i32
    %c0_i32_1 = arith.constant 0 : i32
    return %c0_i32, %c0_i32_0 : i32, i32
  }
  func.func @transform_2(%arg0: i32, %arg1: i32) -> (i32, i32) {
    %c0_i32 = arith.constant 0 : i32
    %c0_i32_0 = arith.constant 0 : i32
    %c0_i32_1 = arith.constant 0 : i32
    return %c0_i32, %c0_i32_0 : i32, i32
  }
  func.func @transform_3(%arg0: i32, %arg1: i32) -> (i32, i32, i32) {
    %c0_i32 = arith.constant 0 : i32
    %c0_i32_0 = arith.constant 0 : i32
    return %arg0, %c0_i32, %arg1 : i32, i32, i32
  }
}

</mosaic_0001>

<llo_original>
// kernel: tpu_custom_call.1
$region0: #{tpu_custom_call.1}
  #allocation0 [shape = 'u32[]', space=smem, size = 0x4, offset = 0x4, fixed_abs, tag = 'smem constant byte address 0x4 - core index']
  #allocation1 [shape = 'u32[144,128]{1,0:T(1,128)}', space=vmem, size = 0x12000, scoped, tag = 'internal scratch']
  %s0 = inlined_call_operand.vmem [shape: f32[2,4,16], index: 0, kind: input, shape index: {}]
  %s1 = inlined_call_operand.vmem [shape: f32[8,4], index: 1, kind: input, shape index: {}]
  %s2 = inlined_call_operand.vmem [shape: f32[8,1], index: 2, kind: input, shape index: {}]
  %s3 = inlined_call_operand.hbm [shape: f32[2,8,16], index: 3, kind: output, shape index: {}]
  %s4 = sld [smem:[#allocation0]]
  $region45: #{tpu_custom_call.1} parent=0
    _
  %s6 = ssub.s32 1, %s4
  %s7 = scalar_select 0, %s6, %s4
  $region1: #{tpu_custom_call.1} parent=0
    #allocation2 [shape = 'u8[8192]{0}', space=vmem, size = 0x2000, scoped, tag = 'output window, operand 0']
    #allocation3 [shape = 's32[2]{0}', space=sflag, size = 0x8, scoped, tag = 'scoped memory for tpu_custom_call.1']
    %8 = vsyncpa [#allocation3], 0
    %s9 = scalar_lea.sflag [#allocation3], 1
    %10 = vsyncpa %s9, 0
    loop: start=0, step=1, limit=4
    $region2: #{tpu_custom_call.1} parent=1 // loop_pre_header
      _
    $region3: #{tpu_custom_call.1} parent=1 // loop_header
      %s12 = sphi 0, %s16
      %p13 = scmp.ge.s32.totalorder %s12, 4
      %s19 = sphi 0, %s31
      %s20 = sphi 0, %s27
      %s21 = sphi 0, %s19
      %s22 = sphi 0, %s20
      %s23 = sphi 0, %s21
      %s24 = sphi 0, %s22
      %s36 = sphi 0, %s38
      %s39 = sphi 0, %s36
      %s40 = sphi 0, %s39
      %s56 = sphi 0, %s40
      %s60 = sphi 0, %s60
      %s62 = sphi 0, %s60
      %s63 = sphi 0, %s62
      %s77 = sphi 0, %s63
      %s81 = sphi 0, %s81
      %s83 = sphi 0, %s81
      %s84 = sphi 0, %s83
      %s98 = sphi 0, %s84
      %s106 = sphi 0, %s108
      %s109 = sphi 0, %s106
      %s110 = sphi 0, %s109
      %s126 = sphi 0, %s110
    $region4: #{tpu_custom_call.1} parent=1 // loop_header_branch
      %15 = sbr.rel (%p13) target = $region8
    $region5: #{tpu_custom_call.1} parent=1 // loop_body
      %s17 = ssub.s32 %s12, 1
      %s18 = ssub.s32 %s12, 2
      %s25 = sadd.s32 1, %s20
      %p26 = scmp.ge.s32.totalorder %s25, 1
      %s27 = scalar_select %p26, 0, %s25
      %s28 = sadd.s32 1, %s19
      %s29 = scalar_select %p26, %s28, %s19
      %p30 = scmp.ge.s32.totalorder %s29, 2
      %s31 = scalar_select %p30, 0, %s29
      %s32 = ssub.s32 %s19, %s31
      %s33 = ssub.s32 %s20, %s27
      %s34 = sor.u32 %s32, %s33
      %p35 = scmp.eq.s32.totalorder %s34, 0
      %s37 = sadd.s32 %s36, 1
      %s38 = scalar_select %p35, %s36, %s37
      %p41 = pneg %p35
      %p42 = scmp.eq.s32.totalorder %s12, 1
      %p43 = por %p41, %p42
      %p44 = scmp.ne.s32.totalorder %s36, %s39
      %p45 = scmp.eq.s32.totalorder %s12, 0
      %p46 = por %p44, %p45
      %p47 = scmp.ne.s32.totalorder %s36, %s39
      %p48 = scmp.eq.s32.totalorder %s17, 1
      %p49 = por %p47, %p48
      %p50 = scmp.ne.s32.totalorder %s39, %s40
      %p51 = scmp.eq.s32.totalorder %s17, 0
      %p52 = por %p50, %p51
      %p53 = scmp.ne.s32.totalorder %s39, %s40
      %p54 = scmp.eq.s32.totalorder %s18, 1
      %p55 = por %p53, %p54
      %p57 = scmp.ne.s32.totalorder %s40, %s56
      %p58 = scmp.eq.s32.totalorder %s18, 0
      %p59 = por %p57, %p58
      %s61 = sadd.s32 %s60, 1
      %p64 = scmp.eq.s32.totalorder %s12, 1
      %p65 = scmp.ne.s32.totalorder %s60, %s62
      %p66 = scmp.eq.s32.totalorder %s12, 0
      %p67 = por %p65, %p66
      %p68 = scmp.ne.s32.totalorder %s60, %s62
      %p69 = scmp.eq.s32.totalorder %s17, 1
      %p70 = por %p68, %p69
      %p71 = scmp.ne.s32.totalorder %s62, %s63
      %p72 = scmp.eq.s32.totalorder %s17, 0
      %p73 = por %p71, %p72
      %p74 = scmp.ne.s32.totalorder %s62, %s63
      %p75 = scmp.eq.s32.totalorder %s18, 1
      %p76 = por %p74, %p75
      %p78 = scmp.ne.s32.totalorder %s63, %s77
      %p79 = scmp.eq.s32.totalorder %s18, 0
      %p80 = por %p78, %p79
      %s82 = sadd.s32 %s81, 1
      %p85 = scmp.eq.s32.totalorder %s12, 1
      %p86 = scmp.ne.s32.totalorder %s81, %s83
      %p87 = scmp.eq.s32.totalorder %s12, 0
      %p88 = por %p86, %p87
      %p89 = scmp.ne.s32.totalorder %s81, %s83
      %p90 = scmp.eq.s32.totalorder %s17, 1
      %p91 = por %p89, %p90
      %p92 = scmp.ne.s32.totalorder %s83, %s84
      %p93 = scmp.eq.s32.totalorder %s17, 0
      %p94 = por %p92, %p93
      %p95 = scmp.ne.s32.totalorder %s83, %s84
      %p96 = scmp.eq.s32.totalorder %s18, 1
      %p97 = por %p95, %p96
      %p99 = scmp.ne.s32.totalorder %s84, %s98
      %p100 = scmp.eq.s32.totalorder %s18, 0
      %p101 = por %p99, %p100
      %s102 = ssub.s32 %s19, %s31
      %s103 = ssub.s32 %s20, %s27
      %s104 = sor.u32 %s102, %s103
      %p105 = scmp.eq.s32.totalorder %s104, 0
      %s107 = sadd.s32 %s106, 1
      %s108 = scalar_select %p105, %s106, %s107
      %p111 = pneg %p105
      %p112 = scmp.eq.s32.totalorder %s12, 1
      %p113 = por %p111, %p112
      %p114 = scmp.ne.s32.totalorder %s106, %s109
      %p115 = scmp.eq.s32.totalorder %s12, 0
      %p116 = por %p114, %p115
      %p117 = scmp.ne.s32.totalorder %s106, %s109
      %p118 = scmp.eq.s32.totalorder %s17, 1
      %p119 = por %p117, %p118
      %p120 = scmp.ne.s32.totalorder %s109, %s110
      %p121 = scmp.eq.s32.totalorder %s17, 0
      %p122 = por %p120, %p121
      %p123 = scmp.ne.s32.totalorder %s109, %s110
      %p124 = scmp.eq.s32.totalorder %s18, 1
      %p125 = por %p123, %p124
      %p127 = scmp.ne.s32.totalorder %s110, %s126
      %p128 = scmp.eq.s32.totalorder %s18, 0
      %p129 = por %p127, %p128
      %p130 = scmp.le.s32.totalorder 1, %s12
      %p131 = scmp.lt.s32.totalorder %s12, 3
      %p132 = pnand %p130, %p131
      %p133 = pneg %p132
      // Predicated region
      $region9: #{tpu_custom_call.1} parent=5 // pred_check
        _
      $region10: #{tpu_custom_call.1} parent=5 // pred_check_branch
        %135 = sbr.rel (%p132) target = $region12
      $region11: #{tpu_custom_call.1} parent=5 // pred_region
        %s136 = ssub.s32 %s12, 1
        // Predicated region
        $region13: #{tpu_custom_call.1} parent=11 // pred_check
          %p137 = pneg %p73
        $region14: #{tpu_custom_call.1} parent=11 // pred_check_branch
          %139 = sbr.rel (%p137) target = $region16
        $region15: #{tpu_custom_call.1} parent=11 // pred_region
          _
        $region16: #{tpu_custom_call.1} parent=11 // pred_fallthru
          _
        // Predicated region
        $region17: #{tpu_custom_call.1} parent=11 // pred_check
          %p140 = pneg %p94
        $region18: #{tpu_custom_call.1} parent=11 // pred_check_branch
          %142 = sbr.rel (%p140) target = $region20
        $region19: #{tpu_custom_call.1} parent=11 // pred_region
          _
        $region20: #{tpu_custom_call.1} parent=11 // pred_fallthru
          _
      $region12: #{tpu_custom_call.1} parent=5 // pred_fallthru
        _
      %p143 = scmp.lt.s32.totalorder %s12, 2
      // Predicated region
      $region21: #{tpu_custom_call.1} parent=5 // pred_check
        %p144 = pneg %p143
      $region22: #{tpu_custom_call.1} parent=5 // pred_check_branch
        %146 = sbr.rel (%p144) target = $region24
      $region23: #{tpu_custom_call.1} parent=5 // pred_region
        // Predicated region
        $region25: #{tpu_custom_call.1} parent=23 // pred_check
          %p147 = pneg %p46
        $region26: #{tpu_custom_call.1} parent=23 // pred_check_branch
          %149 = sbr.rel (%p147) target = $region28
        $region27: #{tpu_custom_call.1} parent=23 // pred_region
          %p150 = scmp.lt.s32.totalorder %s19, 1
          %s151 = scalar_select %p150, %s19, 1
          %p152 = scmp.lt.s32.totalorder %s20, 0
          %s153 = scalar_select %p152, %s20, 0
          %s154 = sadd.s32 %s153, %s151
          %s155 = smul.addr %s154, 4
          %s156 = scalar_lea.vmem %s0, %s155
        $region28: #{tpu_custom_call.1} parent=23 // pred_fallthru
          _
      $region24: #{tpu_custom_call.1} parent=5 // pred_fallthru
        _
      %p157 = scmp.le.s32.totalorder 1, %s12
      %p158 = scmp.lt.s32.totalorder %s12, 3
      %p159 = pnand %p157, %p158
      %p160 = pneg %p159
      // Predicated region
      $region29: #{tpu_custom_call.1} parent=5 // pred_check
        _
      $region30: #{tpu_custom_call.1} parent=5 // pred_check_branch
        %162 = sbr.rel (%p159) target = $region32
      $region31: #{tpu_custom_call.1} parent=5 // pred_region
        %s163 = ssub.s32 %s12, 1
        %p164 = scmp.lt.s32.totalorder %s21, 1
        %s165 = scalar_select %p164, %s21, 1
        %p166 = scmp.lt.s32.totalorder %s22, 0
        %s167 = scalar_select %p166, %s22, 0
        %s168 = sadd.s32 %s167, %s165
        %s169 = smul.addr %s168, 4
        %s170 = scalar_lea.vmem %s0, %s169
        %p171 = pneg %p52
        %p172 = pneg %p49
        %p173 = pneg %p73
        %p174 = pneg %p70
        %p175 = pneg %p94
        %p176 = pneg %p91
        %p177 = pneg %p122
        %p178 = pneg %p119
        %s179 = sand.u32 %s109, 1
        %s180 = scalar_lea.sflag [#allocation3], %s179
        %s181 = sand.u32 %s109, 1
        %s182 = smul.addr %s181, 8
        %s183 = scalar_lea.vmem [#allocation2], %s182
        %p184 = scmp.lt.s32.totalorder %s21, 1
        %s185 = scalar_select %p184, %s21, 1
        %p186 = scmp.lt.s32.totalorder %s22, 0
        %s187 = scalar_select %p186, %s22, 0
        %s188 = sadd.s32 %s187, %s185
        %s189 = smul.addr %s188, 4
        %s190 = scalar_lea.vmem %s0, %s189
        %v191 = vld [vmem:[%s190] sm:$0xf]
        %v192 = vmax.f32 %v191, 0.0
        %v193 = vld [vmem:[%s1] sm:$0xff]
        %v194 = vld [vmem:[%s2] sm:$0xff]
        %196 = vset.pattern.permute.xlu0 0
        %197 = vperm.xlu0 %196, %v194
        %v198 = vpop.permute.xlu0 %197
        %vm200 = vcmask 31744
        %v202 = vsel %vm200, %v193, 0
        %vm204 = vcmask 1043456
        %v206 = vsel %vm204, %v192, 0
        %208 = vmatprep.subr.mxu0 0.0
        %209 = vmatpush1.msra.mxu0 0.0
        %210 = vmatprep.subr.mxu0 0.0
        %211 = vmatpush1.msra.mxu0 0.0
        %212 = vmatprep.subr.mxu0 0.0
        %213 = vmatpush1.msra.mxu0 0.0
        %214 = vmatprep.subr.mxu0 0.0
        %215 = vmatpush1.msra.mxu0 0.0
        %216 = vmatprep.subr.mxu0 0.0
        %217 = vmatpush1.msra.mxu0 0.0
        %218 = vmatprep.subr.mxu0 0.0
        %219 = vmatpush1.msra.mxu0 0.0
        %220 = vmatprep.subr.mxu0 0.0
        %221 = vmatpush1.msra.mxu0 0.0
        %222 = vmatprep.subr.mxu0 0.0
        %223 = vmatpush1.msra.mxu0 0.0
        %224 = vmatprep.subr.mxu0 0.0
        %225 = vmatpush1.msra.mxu0 0.0
        %226 = vmatprep.subr.mxu0 0.0
        %227 = vmatpush1.msra.mxu0 0.0
        %228 = vmatprep.subr.mxu0 0.0
        %229 = vmatpush1.msra.mxu0 0.0
        %230 = vmatprep.subr.mxu0 0.0
        %231 = vmatpush1.msra.mxu0 0.0
        %232 = vmatprep.subr.mxu0 0.0
        %233 = vmatpush1.msra.mxu0 0.0
        %234 = vmatprep.subr.mxu0 0.0
        %235 = vmatpush1.msra.mxu0 0.0
        %236 = vmatprep.subr.mxu0 0.0
        %237 = vmatpush1.msra.mxu0 0.0
        %238 = vmatprep.subr.mxu0 0.0
        %239 = vmatpush1.msra.mxu0 %v206
        %240 = vmatprep.subr.mxu0 0.0
        %241 = vmatpush2.msra.mxu0 0.0
        %242 = vmatprep.subr.mxu0 0.0
        %243 = vmatpush2.msra.mxu0 0.0
        %244 = vmatprep.subr.mxu0 0.0
        %245 = vmatpush2.msra.mxu0 0.0
        %246 = vmatprep.subr.mxu0 0.0
        %247 = vmatpush2.msra.mxu0 0.0
        %248 = vmatprep.subr.mxu0 0.0
        %249 = vmatpush2.msra.mxu0 0.0
        %250 = vmatprep.subr.mxu0 0.0
        %251 = vmatpush2.msra.mxu0 0.0
        %252 = vmatprep.subr.mxu0 0.0
        %253 = vmatpush2.msra.mxu0 0.0
        %254 = vmatprep.subr.mxu0 0.0
        %255 = vmatpush2.msra.mxu0 0.0
        %256 = vmatprep.subr.mxu0 0.0
        %257 = vmatpush2.msra.mxu0 0.0
        %258 = vmatprep.subr.mxu0 0.0
        %259 = vmatpush2.msra.mxu0 0.0
        %260 = vmatprep.subr.mxu0 0.0
        %261 = vmatpush2.msra.mxu0 0.0
        %262 = vmatprep.subr.mxu0 0.0
        %263 = vmatpush2.msra.mxu0 0.0
        %264 = vmatprep.subr.mxu0 0.0
        %265 = vmatpush2.msra.mxu0 0.0
        %266 = vmatprep.subr.mxu0 0.0
        %267 = vmatpush2.msra.mxu0 0.0
        %268 = vmatprep.subr.mxu0 0.0
        %269 = vmatpush2.msra.mxu0 0.0
        %270 = vmatprep.subr.mxu0 0.0
        %271 = vmatpush2.msra.mxu0 0.0
        %272 = vmatprep.mubr.f32.mxu0 0.0
        %273 = vmatmul.mubr.f32.gmra.mxu0 %v202
        %v274 = vpop.f32.mrf.mxu0
        %v275 = vadd.f32 %v198, %v274
        %v276 = vpop.f32.mrf.mxu0
        %277 = vdwg.mxu0
        %vm278 = vcmask 130048
        %279 = vst.msk [vmem:[%s183] sm:$0xff] %vm278, %v275
        %s280 = sand.u32 %s109, 1
        %s281 = scalar_lea.sflag [#allocation3], %s280
        %s282 = sand.u32 %s109, 1
        %s283 = smul.addr %s282, 8
        %s284 = scalar_lea.vmem [#allocation2], %s283
        // Predicated region
        $region33: #{tpu_custom_call.1} parent=31 // pred_check
          %p285 = pneg %p119
        $region34: #{tpu_custom_call.1} parent=31 // pred_check_branch
          %287 = sbr.rel (%p285) target = $region36
        $region35: #{tpu_custom_call.1} parent=31 // pred_region
          %s289 = ssub.s32 128, 128
          %290 = vsyncadd %s281, %s289
          %s291 = sadd.s32 %s22, %s21
          %s292 = smul.addr %s291, 128
          %s293 = scalar_lea.hbm %s3, %s292
          %s295 = sshll.u32 %s284, 4
          %s296 = int_to_ptr.vmem [resolvable:$true] %s295
          %298 = dma.vmem_to_hbm [thread:$0]  %s296, 128, %s293, %s281
        $region36: #{tpu_custom_call.1} parent=31 // pred_fallthru
          _
      $region32: #{tpu_custom_call.1} parent=5 // pred_fallthru
        _
      %p299 = scmp.le.s32.totalorder 2, %s12
      // Predicated region
      $region37: #{tpu_custom_call.1} parent=5 // pred_check
        %p300 = pneg %p299
      $region38: #{tpu_custom_call.1} parent=5 // pred_check_branch
        %302 = sbr.rel (%p300) target = $region40
      $region39: #{tpu_custom_call.1} parent=5 // pred_region
        %s303 = ssub.s32 %s12, 2
        // Predicated region
        $region41: #{tpu_custom_call.1} parent=39 // pred_check
          %p304 = pneg %p125
        $region42: #{tpu_custom_call.1} parent=39 // pred_check_branch
          %306 = sbr.rel (%p304) target = $region44
        $region43: #{tpu_custom_call.1} parent=39 // pred_region
          %s307 = sand.u32 %s110, 1
          %s308 = scalar_lea.sflag [#allocation3], %s307
          %s309 = sand.u32 %s110, 1
          %s310 = smul.addr %s309, 8
          %s311 = scalar_lea.vmem [#allocation2], %s310
          %312 = dma.done %s308, 128
        $region44: #{tpu_custom_call.1} parent=39 // pred_fallthru
          _
      $region40: #{tpu_custom_call.1} parent=5 // pred_fallthru
        _
    $region6: #{tpu_custom_call.1} parent=1 // loop_footer
      %s16 = sadd.s32 1, %s12
    $region7: #{tpu_custom_call.1} parent=1 // loop_footer_branch
      %11 = sbr.rel target = $region3
    $region8: #{tpu_custom_call.1} parent=1 // loop_exit
      _
    %313 = vsyncpa [#allocation3], 1
    %s314 = scalar_lea.sflag [#allocation3], 1
    %315 = vsyncpa %s314, 1

</llo_original>
